<compile_context>
chip_gen: v7x
topology: tpu7x:2x2x1
jax: 0.10.0
libtpu: 0.0.40
codegen_flags: <defaults>
</compile_context>

<pallas_src>
import functools

import jax
import jax.numpy as jnp
from jax import lax
from jax.experimental import pallas as pl
from jax.experimental.pallas import tpu as pltpu


def _round_up(x, m):
    return ((x + m - 1) // m) * m


def _vmem_plan():
    """Return (block_budget_bytes, vmem_limit_bytes, min_grid_steps) per chip gen."""
    vmem_bytes = 0
    try:
        vmem_bytes = int(pltpu.get_tpu_info().vmem_capacity_bytes)
    except Exception:
        vmem_bytes = 0
    if vmem_bytes >= 128 * 1024 * 1024:
        # v5e / v6e class: 128 MiB physical VMEM -> bigger blocks, generous limit.
        return 8 * 1024 * 1024, 64 * 1024 * 1024, 2
    # v7x class (64 MiB physical VMEM) or unknown: keep blocks modest, leave
    # headroom under the limit, and give both TensorCores >=4 pipelined steps.
    return 6 * 1024 * 1024, 44 * 1024 * 1024, 4


def _select_tile_rows(rows, dim, dtype_bytes, block_budget_bytes, min_steps):
    """Largest sublane-aligned row tile that fits the f32-aware byte budget."""
    sublane = {4: 8, 2: 16, 1: 32}.get(dtype_bytes, 8)
    # Budget the in-kernel f32 working set (x_f32, centered, y ~ 3 * 4 B/elem)
    # on top of the I/O block dtype, so bf16/int8 inputs stay inside VMEM.
    per_row = dim * (dtype_bytes + 3 * 4)
    tile = (block_budget_bytes // max(per_row, 1)) // sublane * sublane
    tile = max(sublane, tile)
    rows_sub = _round_up(rows, sublane)
    tile = min(tile, rows_sub)
    # Give the DMA pipeline (and both v7x TensorCores) at least `min_steps`
    # blocks when the row count allows it without dropping below one sublane
    # group.  On 1-TC chips the extra ~0.35us step is negligible and still
    # buys prefetch/compute overlap.
    if min_steps > 1 and rows_sub >= min_steps * sublane:
        tile = min(tile, _round_up(pl.cdiv(rows_sub, min_steps), sublane))
    return max(sublane, (tile // sublane) * sublane)


def _layernorm_kernel(x_ref, w_ref, b_ref, o_ref, *, eps, dim):
    # x_ref: (tile_rows, dim) tile in VMEM (dim is the TRUE last dim);
    # w_ref / b_ref: (1, dim).  All accumulation in f32, rsqrt on the EUP.
    x = x_ref[...].astype(jnp.float32)
    inv_dim = 1.0 / dim
    mean = jnp.sum(x, axis=-1, keepdims=True) * inv_dim
    xc = x - mean
    var = jnp.sum(xc * xc, axis=-1, keepdims=True) * inv_dim   # unbiased=False
    inv = lax.rsqrt(var + eps)
    y = xc * inv * w_ref[...].astype(jnp.float32) + b_ref[...].astype(jnp.float32)
    o_ref[...] = y.astype(o_ref.dtype)


def _layernorm_grouped_kernel(x_ref, w_ref, b_ref, o_ref, *, eps, dim, groups):
    # Lane-dense small-dim path: each kernel row packs `groups` independent
    # LayerNorm rows of width `dim` along the 128 lanes.  Group sums are exact
    # f32 segmented reductions over static lane slices.
    x = x_ref[...].astype(jnp.float32)
    inv_dim = 1.0 / dim
    gd = dim * groups
    lane = lax.broadcasted_iota(jnp.int32, (1, gd), 1)
    masks = [(lane >= k * dim) & (lane < (k + 1) * dim) for k in range(groups)]

    mean = jnp.zeros_like(x)
    for k in range(groups):
        s = jnp.sum(x[:, k * dim:(k + 1) * dim], axis=-1, keepdims=True) * inv_dim
        mean = jnp.where(masks[k], s, mean)
    xc = x - mean
    sq = xc * xc
    var = jnp.zeros_like(x)
    for k in range(groups):
        s = jnp.sum(sq[:, k * dim:(k + 1) * dim], axis=-1, keepdims=True) * inv_dim
        var = jnp.where(masks[k], s, var)
    inv = lax.rsqrt(var + eps)
    y = xc * inv * w_ref[...].astype(jnp.float32) + b_ref[...].astype(jnp.float32)
    o_ref[...] = y.astype(o_ref.dtype)


def layer_norm(x, weight, bias, eps=1e-6):
    """LayerNorm over the last axis of x. x: (..., dim). eps default matches the module (1e-6)."""
    orig_shape = x.shape
    dim = orig_shape[-1]
    assert weight.shape == (dim,) and bias.shape == (dim,)

    rows = 1
    for s in orig_shape[:-1]:
        rows *= s

    dtype_bytes = jnp.dtype(x.dtype).itemsize
    block_budget, vmem_limit, min_steps = _vmem_plan()

    # Lane-dense path for tiny dims: pack g = 128/dim rows per 128-lane kernel
    # row (free, contiguous reshape) -> unmasked full-lane stores, no HBM
    # inflation from lane padding.
    groups = 0
    if dim < 128 and dim >= 16 and 128 % dim == 0 and rows % (128 // dim) == 0:
        groups = 128 // dim

    if groups:
        k_rows, k_dim = rows // groups, dim * groups
        x2 = x.reshape(k_rows, k_dim)
        w2 = jnp.tile(weight, groups).reshape(1, k_dim)
        b2 = jnp.tile(bias, groups).reshape(1, k_dim)
        kernel = functools.partial(_layernorm_grouped_kernel, eps=eps, dim=dim,
                                   groups=groups)
    else:
        k_rows, k_dim = rows, dim
        x2 = x.reshape(k_rows, k_dim)
        w2 = weight.reshape(1, k_dim)
        b2 = bias.reshape(1, k_dim)
        kernel = functools.partial(_layernorm_kernel, eps=eps, dim=dim)

    tile_rows = _select_tile_rows(k_rows, k_dim, dtype_bytes, block_budget, min_steps)
    grid = (pl.cdiv(k_rows, tile_rows),)

    cost = pl.CostEstimate(
        flops=8 * rows * dim,
        transcendentals=rows,
        bytes_accessed=2 * rows * dim * dtype_bytes
        + 2 * dim * jnp.dtype(weight.dtype).itemsize,
    )

    out = pl.pallas_call(
        kernel,
        out_shape=jax.ShapeDtypeStruct((k_rows, k_dim), x.dtype),
        grid_spec=pltpu.PrefetchScalarGridSpec(
            num_scalar_prefetch=0,
            grid=grid,
            in_specs=[
                pl.BlockSpec((tile_rows, k_dim), lambda i: (i, 0)),
                pl.BlockSpec((1, k_dim), lambda i: (0, 0)),
                pl.BlockSpec((1, k_dim), lambda i: (0, 0)),
            ],
            out_specs=pl.BlockSpec((tile_rows, k_dim), lambda i: (i, 0)),
        ),
        compiler_params=pltpu.CompilerParams(
            dimension_semantics=("parallel",),
            vmem_limit_bytes=vmem_limit,
        ),
        cost_estimate=cost,
    )(x2, w2, b2)

    return out.reshape(orig_shape)


def layer_norm_ref(x, weight, bias, eps=1e-6):
    x32 = x.astype(jnp.float32)
    mean = x32.mean(-1, keepdims=True)
    var = ((x32 - mean) ** 2).mean(-1, keepdims=True)
    return ((x32 - mean) / jnp.sqrt(var + eps) * weight.astype(jnp.float32)
            + bias.astype(jnp.float32)).astype(x.dtype)


if __name__ == "__main__":
    key = jax.random.PRNGKey(0)
    k1, k2, k3, k4 = jax.random.split(key, 4)

    # Case 1: tiny dim (32) -> lane-dense grouped path (4 rows packed per 128 lanes).
    x1 = jax.random.normal(k1, (2, 8, 32), dtype=jnp.float32)
    w1 = jnp.ones((32,), dtype=jnp.float32)     # nn.Parameter(torch.ones(dim))
    b1 = jnp.zeros((32,), dtype=jnp.float32)    # nn.Parameter(torch.zeros(dim))
    o1 = jax.block_until_ready(layer_norm(x1, w1, b1, eps=1e-6))
    r1 = layer_norm_ref(x1, w1, b1, eps=1e-6)
    assert o1.shape == x1.shape
    assert jnp.allclose(o1, r1, atol=1e-5, rtol=1e-5), "mismatch vs reference (case 1)"

    # Case 2: lane-dense dim, non-trivial affine, row count not divisible by the tile.
    x2m = jax.random.normal(k2, (3, 7, 256), dtype=jnp.float32)
    w2m = jnp.linspace(0.5, 1.5, 256, dtype=jnp.float32)
    b2m = jnp.linspace(-0.1, 0.1, 256, dtype=jnp.float32)
    o2 = jax.block_until_ready(layer_norm(x2m, w2m, b2m, eps=1e-6))
    r2 = layer_norm_ref(x2m, w2m, b2m, eps=1e-6)
    assert o2.shape == x2m.shape
    assert jnp.allclose(o2, r2, atol=1e-5, rtol=1e-5), "mismatch vs reference (case 2)"

    # Case 3: dim not a multiple of 128 -> true-dim block (no pad/slice), overhanging last row block.
    x3m = jax.random.normal(k3, (5, 3, 200), dtype=jnp.float32)
    w3m = jnp.linspace(0.8, 1.2, 200, dtype=jnp.float32)
    b3m = jnp.linspace(-0.05, 0.05, 200, dtype=jnp.float32)
    o3 = jax.block_until_ready(layer_norm(x3m, w3m, b3m, eps=1e-6))
    r3 = layer_norm_ref(x3m, w3m, b3m, eps=1e-6)
    assert o3.shape == x3m.shape
    assert jnp.allclose(o3, r3, atol=1e-5, rtol=1e-5), "mismatch vs reference (case 3)"

    # Case 4: bf16 input (f32 accumulation inside the kernel, bf16 I/O tiles).
    x4m = jax.random.normal(k4, (4, 32, 256), dtype=jnp.float32).astype(jnp.bfloat16)
    w4m = jnp.linspace(0.9, 1.1, 256, dtype=jnp.float32).astype(jnp.bfloat16)
    b4m = jnp.linspace(-0.2, 0.2, 256, dtype=jnp.float32).astype(jnp.bfloat16)
    o4 = jax.block_until_ready(layer_norm(x4m, w4m, b4m, eps=1e-6))
    r4 = layer_norm_ref(x4m, w4m, b4m, eps=1e-6)
    assert o4.shape == x4m.shape
    assert jnp.allclose(o4.astype(jnp.float32), r4.astype(jnp.float32),
                        atol=3e-2, rtol=3e-2), "mismatch vs reference (case 4)"

    print("KERNEL_OK")
</pallas_src>

<mosaic_0001>
module attributes {stable_mosaic.version = 11 : i64} {
  func.func @_layernorm_grouped_kernel(%arg0: i32, %arg1: memref<8x128xf32, #tpu.memory_space<vmem>>, %arg2: memref<1x128xf32, #tpu.memory_space<vmem>>, %arg3: memref<1x128xf32, #tpu.memory_space<vmem>>, %arg4: memref<8x128xf32, #tpu.memory_space<vmem>>) attributes {dimension_semantics = [#tpu.dimension_semantics<parallel>], iteration_bounds = array<i64: 1>, scalar_prefetch = 0 : i64, scratch_operands = 0 : i64, tpu.core_type = #tpu.core_type<tc>, window_params = [{transform_indices = @transform_0, window_bounds = array<i64: 8, 128>}, {pipeline_mode = #tpu.pipeline_mode<synchronous>, transform_indices = @transform_1, window_bounds = array<i64: 1, 128>}, {pipeline_mode = #tpu.pipeline_mode<synchronous>, transform_indices = @transform_2, window_bounds = array<i64: 1, 128>}, {transform_indices = @transform_3, window_bounds = array<i64: 8, 128>}]} {
    %c0 = arith.constant 0 : index
    %c0_0 = arith.constant 0 : index
    %0 = vector.load %arg1[%c0, %c0_0] : memref<8x128xf32, #tpu.memory_space<vmem>>, vector<8x128xf32>
    %1 = tpu.iota {dimensions = array<i32: 1>} : vector<1x128xi32>
    %c0_i32 = arith.constant 0 : i32
    %2 = vector.broadcast %c0_i32 : i32 to vector<1x128xi32>
    %3 = arith.cmpi sge, %1, %2 : vector<1x128xi32>
    %c32_i32 = arith.constant 32 : i32
    %4 = vector.broadcast %c32_i32 : i32 to vector<1x128xi32>
    %5 = arith.cmpi slt, %1, %4 : vector<1x128xi32>
    %6 = arith.andi %3, %5 : vector<1x128xi1>
    %c32_i32_1 = arith.constant 32 : i32
    %7 = vector.broadcast %c32_i32_1 : i32 to vector<1x128xi32>
    %8 = arith.cmpi sge, %1, %7 : vector<1x128xi32>
    %c64_i32 = arith.constant 64 : i32
    %9 = vector.broadcast %c64_i32 : i32 to vector<1x128xi32>
    %10 = arith.cmpi slt, %1, %9 : vector<1x128xi32>
    %11 = arith.andi %8, %10 : vector<1x128xi1>
    %c64_i32_2 = arith.constant 64 : i32
    %12 = vector.broadcast %c64_i32_2 : i32 to vector<1x128xi32>
    %13 = arith.cmpi sge, %1, %12 : vector<1x128xi32>
    %c96_i32 = arith.constant 96 : i32
    %14 = vector.broadcast %c96_i32 : i32 to vector<1x128xi32>
    %15 = arith.cmpi slt, %1, %14 : vector<1x128xi32>
    %16 = arith.andi %13, %15 : vector<1x128xi1>
    %c96_i32_3 = arith.constant 96 : i32
    %17 = vector.broadcast %c96_i32_3 : i32 to vector<1x128xi32>
    %18 = arith.cmpi sge, %1, %17 : vector<1x128xi32>
    %c128_i32 = arith.constant 128 : i32
    %19 = vector.broadcast %c128_i32 : i32 to vector<1x128xi32>
    %20 = arith.cmpi slt, %1, %19 : vector<1x128xi32>
    %21 = arith.andi %18, %20 : vector<1x128xi1>
    %cst = arith.constant 0.000000e+00 : f32
    %22 = vector.broadcast %cst : f32 to vector<8x128xf32>
    %23 = vector.extract_strided_slice %0 {offsets = [0, 0], sizes = [8, 32], strides = [1, 1]} : vector<8x128xf32> to vector<8x32xf32>
    %cst_4 = arith.constant dense<0.000000e+00> : vector<8xf32>
    %24 = vector.multi_reduction <add>, %23, %cst_4 [1] : vector<8x32xf32> to vector<8xf32>
    %25 = vector.shape_cast %24 : vector<8xf32> to vector<8x1xf32>
    %cst_5 = arith.constant 3.125000e-02 : f32
    %26 = vector.broadcast %cst_5 : f32 to vector<8x1xf32>
    %27 = arith.mulf %25, %26 : vector<8x1xf32>
    %28 = vector.shape_cast %6 : vector<1x128xi1> to vector<1x128xi1>
    %29 = vector.broadcast %28 : vector<1x128xi1> to vector<8x128xi1>
    %30 = vector.shape_cast %27 : vector<8x1xf32> to vector<8x1xf32>
    %31 = vector.broadcast %30 : vector<8x1xf32> to vector<8x128xf32>
    %32 = arith.select %29, %31, %22 : vector<8x128xi1>, vector<8x128xf32>
    %33 = vector.extract_strided_slice %0 {offsets = [0, 32], sizes = [8, 32], strides = [1, 1]} : vector<8x128xf32> to vector<8x32xf32>
    %cst_6 = arith.constant dense<0.000000e+00> : vector<8xf32>
    %34 = vector.multi_reduction <add>, %33, %cst_6 [1] : vector<8x32xf32> to vector<8xf32>
    %35 = vector.shape_cast %34 : vector<8xf32> to vector<8x1xf32>
    %cst_7 = arith.constant 3.125000e-02 : f32
    %36 = vector.broadcast %cst_7 : f32 to vector<8x1xf32>
    %37 = arith.mulf %35, %36 : vector<8x1xf32>
    %38 = vector.shape_cast %11 : vector<1x128xi1> to vector<1x128xi1>
    %39 = vector.broadcast %38 : vector<1x128xi1> to vector<8x128xi1>
    %40 = vector.shape_cast %37 : vector<8x1xf32> to vector<8x1xf32>
    %41 = vector.broadcast %40 : vector<8x1xf32> to vector<8x128xf32>
    %42 = arith.select %39, %41, %32 : vector<8x128xi1>, vector<8x128xf32>
    %43 = vector.extract_strided_slice %0 {offsets = [0, 64], sizes = [8, 32], strides = [1, 1]} : vector<8x128xf32> to vector<8x32xf32>
    %cst_8 = arith.constant dense<0.000000e+00> : vector<8xf32>
    %44 = vector.multi_reduction <add>, %43, %cst_8 [1] : vector<8x32xf32> to vector<8xf32>
    %45 = vector.shape_cast %44 : vector<8xf32> to vector<8x1xf32>
    %cst_9 = arith.constant 3.125000e-02 : f32
    %46 = vector.broadcast %cst_9 : f32 to vector<8x1xf32>
    %47 = arith.mulf %45, %46 : vector<8x1xf32>
    %48 = vector.shape_cast %16 : vector<1x128xi1> to vector<1x128xi1>
    %49 = vector.broadcast %48 : vector<1x128xi1> to vector<8x128xi1>
    %50 = vector.shape_cast %47 : vector<8x1xf32> to vector<8x1xf32>
    %51 = vector.broadcast %50 : vector<8x1xf32> to vector<8x128xf32>
    %52 = arith.select %49, %51, %42 : vector<8x128xi1>, vector<8x128xf32>
    %53 = vector.extract_strided_slice %0 {offsets = [0, 96], sizes = [8, 32], strides = [1, 1]} : vector<8x128xf32> to vector<8x32xf32>
    %cst_10 = arith.constant dense<0.000000e+00> : vector<8xf32>
    %54 = vector.multi_reduction <add>, %53, %cst_10 [1] : vector<8x32xf32> to vector<8xf32>
    %55 = vector.shape_cast %54 : vector<8xf32> to vector<8x1xf32>
    %cst_11 = arith.constant 3.125000e-02 : f32
    %56 = vector.broadcast %cst_11 : f32 to vector<8x1xf32>
    %57 = arith.mulf %55, %56 : vector<8x1xf32>
    %58 = vector.shape_cast %21 : vector<1x128xi1> to vector<1x128xi1>
    %59 = vector.broadcast %58 : vector<1x128xi1> to vector<8x128xi1>
    %60 = vector.shape_cast %57 : vector<8x1xf32> to vector<8x1xf32>
    %61 = vector.broadcast %60 : vector<8x1xf32> to vector<8x128xf32>
    %62 = arith.select %59, %61, %52 : vector<8x128xi1>, vector<8x128xf32>
    %63 = arith.subf %0, %62 : vector<8x128xf32>
    %64 = arith.mulf %63, %63 : vector<8x128xf32>
    %cst_12 = arith.constant 0.000000e+00 : f32
    %65 = vector.broadcast %cst_12 : f32 to vector<8x128xf32>
    %66 = vector.extract_strided_slice %64 {offsets = [0, 0], sizes = [8, 32], strides = [1, 1]} : vector<8x128xf32> to vector<8x32xf32>
    %cst_13 = arith.constant dense<0.000000e+00> : vector<8xf32>
    %67 = vector.multi_reduction <add>, %66, %cst_13 [1] : vector<8x32xf32> to vector<8xf32>
    %68 = vector.shape_cast %67 : vector<8xf32> to vector<8x1xf32>
    %cst_14 = arith.constant 3.125000e-02 : f32
    %69 = vector.broadcast %cst_14 : f32 to vector<8x1xf32>
    %70 = arith.mulf %68, %69 : vector<8x1xf32>
    %71 = vector.shape_cast %6 : vector<1x128xi1> to vector<1x128xi1>
    %72 = vector.broadcast %71 : vector<1x128xi1> to vector<8x128xi1>
    %73 = vector.shape_cast %70 : vector<8x1xf32> to vector<8x1xf32>
    %74 = vector.broadcast %73 : vector<8x1xf32> to vector<8x128xf32>
    %75 = arith.select %72, %74, %65 : vector<8x128xi1>, vector<8x128xf32>
    %76 = vector.extract_strided_slice %64 {offsets = [0, 32], sizes = [8, 32], strides = [1, 1]} : vector<8x128xf32> to vector<8x32xf32>
    %cst_15 = arith.constant dense<0.000000e+00> : vector<8xf32>
    %77 = vector.multi_reduction <add>, %76, %cst_15 [1] : vector<8x32xf32> to vector<8xf32>
    %78 = vector.shape_cast %77 : vector<8xf32> to vector<8x1xf32>
    %cst_16 = arith.constant 3.125000e-02 : f32
    %79 = vector.broadcast %cst_16 : f32 to vector<8x1xf32>
    %80 = arith.mulf %78, %79 : vector<8x1xf32>
    %81 = vector.shape_cast %11 : vector<1x128xi1> to vector<1x128xi1>
    %82 = vector.broadcast %81 : vector<1x128xi1> to vector<8x128xi1>
    %83 = vector.shape_cast %80 : vector<8x1xf32> to vector<8x1xf32>
    %84 = vector.broadcast %83 : vector<8x1xf32> to vector<8x128xf32>
    %85 = arith.select %82, %84, %75 : vector<8x128xi1>, vector<8x128xf32>
    %86 = vector.extract_strided_slice %64 {offsets = [0, 64], sizes = [8, 32], strides = [1, 1]} : vector<8x128xf32> to vector<8x32xf32>
    %cst_17 = arith.constant dense<0.000000e+00> : vector<8xf32>
    %87 = vector.multi_reduction <add>, %86, %cst_17 [1] : vector<8x32xf32> to vector<8xf32>
    %88 = vector.shape_cast %87 : vector<8xf32> to vector<8x1xf32>
    %cst_18 = arith.constant 3.125000e-02 : f32
    %89 = vector.broadcast %cst_18 : f32 to vector<8x1xf32>
    %90 = arith.mulf %88, %89 : vector<8x1xf32>
    %91 = vector.shape_cast %16 : vector<1x128xi1> to vector<1x128xi1>
    %92 = vector.broadcast %91 : vector<1x128xi1> to vector<8x128xi1>
    %93 = vector.shape_cast %90 : vector<8x1xf32> to vector<8x1xf32>
    %94 = vector.broadcast %93 : vector<8x1xf32> to vector<8x128xf32>
    %95 = arith.select %92, %94, %85 : vector<8x128xi1>, vector<8x128xf32>
    %96 = vector.extract_strided_slice %64 {offsets = [0, 96], sizes = [8, 32], strides = [1, 1]} : vector<8x128xf32> to vector<8x32xf32>
    %cst_19 = arith.constant dense<0.000000e+00> : vector<8xf32>
    %97 = vector.multi_reduction <add>, %96, %cst_19 [1] : vector<8x32xf32> to vector<8xf32>
    %98 = vector.shape_cast %97 : vector<8xf32> to vector<8x1xf32>
    %cst_20 = arith.constant 3.125000e-02 : f32
    %99 = vector.broadcast %cst_20 : f32 to vector<8x1xf32>
    %100 = arith.mulf %98, %99 : vector<8x1xf32>
    %101 = vector.shape_cast %21 : vector<1x128xi1> to vector<1x128xi1>
    %102 = vector.broadcast %101 : vector<1x128xi1> to vector<8x128xi1>
    %103 = vector.shape_cast %100 : vector<8x1xf32> to vector<8x1xf32>
    %104 = vector.broadcast %103 : vector<8x1xf32> to vector<8x128xf32>
    %105 = arith.select %102, %104, %95 : vector<8x128xi1>, vector<8x128xf32>
    %cst_21 = arith.constant 9.99999997E-7 : f32
    %106 = vector.broadcast %cst_21 : f32 to vector<8x128xf32>
    %107 = arith.addf %105, %106 : vector<8x128xf32>
    %108 = math.rsqrt %107 : vector<8x128xf32>
    %109 = arith.mulf %63, %108 : vector<8x128xf32>
    %c0_22 = arith.constant 0 : index
    %c0_23 = arith.constant 0 : index
    %110 = vector.load %arg2[%c0_22, %c0_23] : memref<1x128xf32, #tpu.memory_space<vmem>>, vector<1x128xf32>
    %111 = vector.broadcast %110 : vector<1x128xf32> to vector<8x128xf32>
    %112 = arith.mulf %109, %111 : vector<8x128xf32>
    %c0_24 = arith.constant 0 : index
    %c0_25 = arith.constant 0 : index
    %113 = vector.load %arg3[%c0_24, %c0_25] : memref<1x128xf32, #tpu.memory_space<vmem>>, vector<1x128xf32>
    %114 = vector.broadcast %113 : vector<1x128xf32> to vector<8x128xf32>
    %115 = arith.addf %112, %114 : vector<8x128xf32>
    %c0_26 = arith.constant 0 : index
    %c0_27 = arith.constant 0 : index
    %116 = vector.load %arg4[%c0_26, %c0_27] : memref<8x128xf32, #tpu.memory_space<vmem>>, vector<8x128xf32>
    tpu.vector_store %arg4[%c0_26, %c0_27], %115 {strides = array<i32>} : memref<8x128xf32, #tpu.memory_space<vmem>>, vector<8x128xf32>,
    return
  }
  func.func @transform_0(%arg0: i32) -> (i32, i32) {
    %c0_i32 = arith.constant 0 : i32
    %c0_i32_0 = arith.constant 0 : i32
    return %arg0, %c0_i32 : i32, i32
  }
  func.func @transform_1(%arg0: i32) -> (i32, i32) {
    %c0_i32 = arith.constant 0 : i32
    %c0_i32_0 = arith.constant 0 : i32
    %c0_i32_1 = arith.constant 0 : i32
    return %c0_i32, %c0_i32_0 : i32, i32
  }
  func.func @transform_2(%arg0: i32) -> (i32, i32) {
    %c0_i32 = arith.constant 0 : i32
    %c0_i32_0 = arith.constant 0 : i32
    %c0_i32_1 = arith.constant 0 : i32
    return %c0_i32, %c0_i32_0 : i32, i32
  }
  func.func @transform_3(%arg0: i32) -> (i32, i32) {
    %c0_i32 = arith.constant 0 : i32
    %c0_i32_0 = arith.constant 0 : i32
    return %arg0, %c0_i32 : i32, i32
  }
}

</mosaic_0001>

<llo_original>
// kernel: tpu_custom_call.1
$region0: #{tpu_custom_call.1}
  #allocation0 [shape = 'u32[]', space=smem, size = 0x4, offset = 0x4, fixed_abs, tag = 'smem constant byte address 0x4 - core index']
  #allocation1 [shape = 'u32[144,128]{1,0:T(1,128)}', space=vmem, size = 0x12000, scoped, tag = 'internal scratch']
  %s0 = inlined_call_operand.hbm [shape: f32[4,128], index: 0, kind: input, shape index: {}]
  %s1 = inlined_call_operand.vmem [shape: f32[1,128], index: 1, kind: input, shape index: {}]
  %s2 = inlined_call_operand.vmem [shape: f32[1,128], index: 2, kind: input, shape index: {}]
  %s3 = inlined_call_operand.hbm [shape: f32[4,128], index: 3, kind: output, shape index: {}]
  %s4 = sld [smem:[#allocation0]]
  $region26: #{tpu_custom_call.1} parent=0
    _
  %s6 = ssub.s32 1, %s4
  %s7 = scalar_select 0, %s6, %s4
  $region1: #{tpu_custom_call.1} parent=0
    #allocation2 [shape = 'u8[4096]{0}', space=vmem, size = 0x1000, scoped, tag = 'input window, operand 0, single buffered']
    #allocation3 [shape = 's32[1]{0}', space=sflag, size = 0x4, scoped, tag = 'scoped memory for tpu_custom_call.1']
    #allocation4 [shape = 's32[1]{0}', space=sflag, size = 0x4, scoped, tag = 'scoped memory for tpu_custom_call.1']
    #allocation5 [shape = 'u8[4096]{0}', space=vmem, size = 0x1000, scoped, tag = 'output window, operand 0, single buffered']
    %8 = vsyncpa [#allocation3], 0
    %9 = vsyncpa [#allocation4], 0
    // Predicated region
    $region2: #{tpu_custom_call.1} parent=1 // pred_check
      _
    $region3: #{tpu_custom_call.1} parent=1 // pred_check_branch
      %11 = sbr.rel (0) target = $region5
    $region4: #{tpu_custom_call.1} parent=1 // pred_region
      %s13 = ssub.s32 128, 64
      %14 = vsyncadd [#allocation3], %s13
      %s15 = sshll.u32 [#allocation2], 4
      %s16 = int_to_ptr.vmem [resolvable:$true] %s15
      %21 = dma.hbm_to_vmem [thread:$0]  %s0, 64, %s16, [#allocation3], 64, 64, 4
    $region5: #{tpu_custom_call.1} parent=1 // pred_fallthru
      _
    // Predicated region
    $region6: #{tpu_custom_call.1} parent=1 // pred_check
      _
    $region7: #{tpu_custom_call.1} parent=1 // pred_check_branch
      %23 = sbr.rel (0) target = $region9
    $region8: #{tpu_custom_call.1} parent=1 // pred_region
      _
    $region9: #{tpu_custom_call.1} parent=1 // pred_fallthru
      _
    // Predicated region
    $region10: #{tpu_custom_call.1} parent=1 // pred_check
      _
    $region11: #{tpu_custom_call.1} parent=1 // pred_check_branch
      %25 = sbr.rel (0) target = $region13
    $region12: #{tpu_custom_call.1} parent=1 // pred_region
      _
    $region13: #{tpu_custom_call.1} parent=1 // pred_fallthru
      _
    // Predicated region
    $region14: #{tpu_custom_call.1} parent=1 // pred_check
      _
    $region15: #{tpu_custom_call.1} parent=1 // pred_check_branch
      %27 = sbr.rel (0) target = $region17
    $region16: #{tpu_custom_call.1} parent=1 // pred_region
      %28 = dma.done [#allocation3], 128
    $region17: #{tpu_custom_call.1} parent=1 // pred_fallthru
      _
    %v29 = vld [vmem:[#allocation2] sm:$0xff]
    %v30 = vlaneseq
    %v31 = vand.u32 %v30, 127
    %vm32 = vcmp.ge.s32.totalorder %v31, 0
    %vm33 = vcmp.lt.s32.totalorder %v31, 32
    %vm34 = vmand %vm32, %vm33
    %vm35 = vcmp.ge.s32.totalorder %v31, 32
    %vm36 = vcmp.lt.s32.totalorder %v31, 64
    %vm37 = vmand %vm35, %vm36
    %vm38 = vcmp.ge.s32.totalorder %v31, 64
    %vm39 = vcmp.lt.s32.totalorder %v31, 96
    %vm40 = vmand %vm38, %vm39
    %vm41 = vcmp.ge.s32.totalorder %v31, 96
    %vm42 = vcmp.lt.s32.totalorder %v31, 128
    %vm43 = vmand %vm41, %vm42
    %vm44 = vcmask 261120
    %v45 = vsel %vm44, %v29, 0.0
    %46 = vadd.xlane.f32.xlu0 %v45
    %v47 = vpop.xlane.xlu0 %46
    %v48 = vmul.f32 %v47, 0.03125
    %v49 = vsel %vm34, 1, 0
    %vm50 = vcmp.eq.s32.totalorder %v49, 1
    %v51 = vsel %vm50, %v48, 0.0
    %53 = vrot.lane.b32.xlu0 %v29, 96
    %v54 = vpop.permute.xlu0 %53
    %v56 = vsel %vm44, %v54, 0.0
    %57 = vadd.xlane.f32.xlu0 %v56
    %v58 = vpop.xlane.xlu0 %57
    %v59 = vmul.f32 %v58, 0.03125
    %v60 = vsel %vm37, 1, 0
    %vm61 = vcmp.eq.s32.totalorder %v60, 1
    %v62 = vsel %vm61, %v59, %v51
    %63 = vrot.lane.b32.xlu0 %v29, 64
    %v64 = vpop.permute.xlu0 %63
    %v66 = vsel %vm44, %v64, 0.0
    %67 = vadd.xlane.f32.xlu0 %v66
    %v68 = vpop.xlane.xlu0 %67
    %v69 = vmul.f32 %v68, 0.03125
    %v70 = vsel %vm40, 1, 0
    %vm71 = vcmp.eq.s32.totalorder %v70, 1
    %v72 = vsel %vm71, %v69, %v62
    %73 = vrot.lane.b32.xlu0 %v29, 32
    %v74 = vpop.permute.xlu0 %73
    %v76 = vsel %vm44, %v74, 0.0
    %77 = vadd.xlane.f32.xlu0 %v76
    %v78 = vpop.xlane.xlu0 %77
    %v79 = vmul.f32 %v78, 0.03125
    %v80 = vsel %vm43, 1, 0
    %vm81 = vcmp.eq.s32.totalorder %v80, 1
    %v82 = vsel %vm81, %v79, %v72
    %v83 = vsub.f32 %v29, %v82
    %v84 = vmul.f32 %v83, %v83
    %v85 = vsel %vm44, %v84, 0.0
    %86 = vadd.xlane.f32.xlu0 %v85
    %v87 = vpop.xlane.xlu0 %86
    %v88 = vmul.f32 %v87, 0.03125
    %v89 = vsel %vm50, %v88, 0.0
    %91 = vrot.lane.b32.xlu0 %v84, 96
    %v92 = vpop.permute.xlu0 %91
    %v94 = vsel %vm44, %v92, 0.0
    %95 = vadd.xlane.f32.xlu0 %v94
    %v96 = vpop.xlane.xlu0 %95
    %v97 = vmul.f32 %v96, 0.03125
    %v98 = vsel %vm61, %v97, %v89
    %99 = vrot.lane.b32.xlu0 %v84, 64
    %v100 = vpop.permute.xlu0 %99
    %v102 = vsel %vm44, %v100, 0.0
    %103 = vadd.xlane.f32.xlu0 %v102
    %v104 = vpop.xlane.xlu0 %103
    %v105 = vmul.f32 %v104, 0.03125
    %v106 = vsel %vm71, %v105, %v98
    %107 = vrot.lane.b32.xlu0 %v84, 32
    %v108 = vpop.permute.xlu0 %107
    %v110 = vsel %vm44, %v108, 0.0
    %111 = vadd.xlane.f32.xlu0 %v110
    %v112 = vpop.xlane.xlu0 %111
    %v113 = vmul.f32 %v112, 0.03125
    %v114 = vsel %vm81, %v113, %v106
    %v115 = vadd.f32 %v114, 1e-06
    %v116 = vrsqrt.pop %v115
    %v117 = vmul.f32 %v83, %v116
    %v118 = vld [vmem:[%s1] sm:$0x1]
    %v120 = vlaneseq
    %v121 = vshrl.u32 %v120, 7
    %v122 = vsub.s32 0, %v121
    %v123 = vrot.slane %v118, %v122
    %v125 = vmul.f32 %v117, %v123
    %v126 = vld [vmem:[%s2] sm:$0x1]
    %v128 = vlaneseq
    %v129 = vshrl.u32 %v128, 7
    %v130 = vsub.s32 0, %v129
    %v131 = vrot.slane %v126, %v130
    %v133 = vadd.f32 %v125, %v131
    %134 = vst [vmem:[#allocation5] sm:$0xff] %v133
    // Predicated region
    $region18: #{tpu_custom_call.1} parent=1 // pred_check
      _
    $region19: #{tpu_custom_call.1} parent=1 // pred_check_branch
      %136 = sbr.rel (0) target = $region21
    $region20: #{tpu_custom_call.1} parent=1 // pred_region
      %s138 = ssub.s32 128, 64
      %139 = vsyncadd [#allocation4], %s138
      %s140 = sshll.u32 [#allocation5], 4
      %s141 = int_to_ptr.vmem [resolvable:$true] %s140
      %146 = dma.vmem_to_hbm [thread:$0]  %s141, 64, %s3, [#allocation4], 64, 64, 4
    $region21: #{tpu_custom_call.1} parent=1 // pred_fallthru
      _
    // Predicated region
    $region22: #{tpu_custom_call.1} parent=1 // pred_check
      _
    $region23: #{tpu_custom_call.1} parent=1 // pred_check_branch
      %148 = sbr.rel (0) target = $region25
    $region24: #{tpu_custom_call.1} parent=1 // pred_region
      %149 = dma.done [#allocation4], 128
    $region25: #{tpu_custom_call.1} parent=1 // pred_fallthru
      _
    %150 = vsyncpa [#allocation3], 1
    %151 = vsyncpa [#allocation4], 1

</llo_original>
